<compile_context>
chip_gen: v7x
topology: tpu7x:2x2x1
jax: 0.10.0
libtpu: 0.0.40
codegen_flags: <defaults>
</compile_context>

<pallas_src>
import jax
import jax.numpy as jnp
from jax.experimental import pallas as pl
from jax.experimental.pallas import tpu as pltpu


def _round_up(a, b):
    return ((a + b - 1) // b) * b


def ffn_kernel(x_ref, w1_ref, b1_ref, w2_ref, b2_ref, o_ref, acc_ref):
    # Grid = (M tiles [parallel], F tiles [arbitrary / reduction]).
    # x_ref:  (tm, Hp)    w1_ref: (Hp, tf)    b1_ref: (1, tf)  [f32]
    # w2_ref: (tf, Hp)    b2_ref: (1, Hp)     [f32]
    # o_ref:  (tm, Hp)    acc_ref: (tm, Hp)   [f32 scratch, resident across F tiles]
    j = pl.program_id(1)

    @pl.when(j == 0)
    def _():
        acc_ref[...] = jnp.zeros_like(acc_ref)

    # First linear (this F-slice) + bias + ReLU, computed in f32.
    h = jnp.dot(x_ref[...], w1_ref[...], preferred_element_type=jnp.float32)
    h = jnp.maximum(h + b1_ref[...], 0.0)

    # Second linear: partial contribution of this F-slice, accumulated in f32.
    acc_ref[...] += jnp.dot(h.astype(w2_ref.dtype), w2_ref[...],
                            preferred_element_type=jnp.float32)

    @pl.when(j == pl.num_programs(1) - 1)
    def _():
        o_ref[...] = (acc_ref[...] + b2_ref[...]).astype(o_ref.dtype)


def ffn_forward(x, w1, b1, w2, b2, *, tm_max=256, tf_max=512, compute_dtype=None):
    """x: (B, S, H) -> (B, S, H).  Computes relu(x @ w1 + b1) @ w2 + b2."""
    B, S, H = x.shape
    F = w1.shape[1]
    M = B * S
    out_dtype = x.dtype
    if compute_dtype is None:
        compute_dtype = x.dtype          # pass jnp.bfloat16 for MXU-peak throughput

    # Pad to hardware-friendly multiples (numerically exact: zero padding).
    Hp = _round_up(H, 128)               # lane-dense loads/stores, full MXU width
    tm = min(tm_max, _round_up(M, 8))    # MXU-sized row tile (256 unless M is tiny)
    Mp = _round_up(M, tm)
    Fp = _round_up(F, 128)
    tf = min(tf_max, Fp)                 # streamed feed-forward (reduction) tile
    Fp = _round_up(Fp, tf)

    x2 = jnp.pad(x.reshape(M, H).astype(compute_dtype),
                 ((0, Mp - M), (0, Hp - H)))
    w1p = jnp.pad(w1.astype(compute_dtype), ((0, Hp - H), (0, Fp - F)))
    w2p = jnp.pad(w2.astype(compute_dtype), ((0, Fp - F), (0, Hp - H)))
    b1p = jnp.pad(b1.astype(jnp.float32).reshape(1, F), ((0, 0), (0, Fp - F)))
    b2p = jnp.pad(b2.astype(jnp.float32).reshape(1, H), ((0, 0), (0, Hp - H)))

    grid = (Mp // tm, Fp // tf)          # reduction (F) axis last, by convention

    out = pl.pallas_call(
        ffn_kernel,
        out_shape=jax.ShapeDtypeStruct((Mp, Hp), out_dtype),
        grid_spec=pltpu.PrefetchScalarGridSpec(
            num_scalar_prefetch=0,
            grid=grid,
            in_specs=[
                pl.BlockSpec((tm, Hp), lambda i, j: (i, 0)),   # x rows (per M tile)
                pl.BlockSpec((Hp, tf), lambda i, j: (0, j)),   # W1 F-slice (streamed)
                pl.BlockSpec((1, tf), lambda i, j: (0, j)),    # b1 F-slice (f32)
                pl.BlockSpec((tf, Hp), lambda i, j: (j, 0)),   # W2 F-slice (streamed)
                pl.BlockSpec((1, Hp), lambda i, j: (0, 0)),    # b2 (grid-invariant, f32)
            ],
            out_specs=pl.BlockSpec((tm, Hp), lambda i, j: (i, 0)),
            scratch_shapes=[pltpu.VMEM((tm, Hp), jnp.float32)],
        ),
        compiler_params=pltpu.CompilerParams(
            dimension_semantics=("parallel", "arbitrary"),
            vmem_limit_bytes=64 * 1024 * 1024,
        ),
    )(x2, w1p, b1p, w2p, b2p)

    return out[:M, :H].reshape(B, S, H)


def init_params(key, hidden_dim, ff_dim, dtype=jnp.float32):
    """Deterministic init mimicking nn.Linear default (U(-1/sqrt(fan_in), 1/sqrt(fan_in)))."""
    k1, k2, k3, k4 = jax.random.split(key, 4)
    lim1 = 1.0 / (hidden_dim ** 0.5)
    lim2 = 1.0 / (ff_dim ** 0.5)
    w1 = jax.random.uniform(k1, (hidden_dim, ff_dim), dtype, -lim1, lim1)
    b1 = jax.random.uniform(k2, (ff_dim,), dtype, -lim1, lim1)
    w2 = jax.random.uniform(k3, (ff_dim, hidden_dim), dtype, -lim2, lim2)
    b2 = jax.random.uniform(k4, (hidden_dim,), dtype, -lim2, lim2)
    return w1, b1, w2, b2


def ffn_reference(x, w1, b1, w2, b2):
    h = jnp.maximum(x @ w1 + b1, 0.0)
    return h @ w2 + b2


if __name__ == "__main__":
    # opts.hiddenDim = 32, opts.FeedForwardSize = 64, opts.dropout = 0.0 (eval mode)
    batch, seq, hidden_dim, ff_dim = 2, 8, 32, 64

    key = jax.random.PRNGKey(0)
    kx, kp = jax.random.split(key)
    x = jax.random.normal(kx, (batch, seq, hidden_dim), jnp.float32)
    w1, b1, w2, b2 = init_params(kp, hidden_dim, ff_dim)

    ref = ffn_reference(x, w1, b1, w2, b2)

    # f32 path: strict parity with the PyTorch module.
    out_f32 = jax.block_until_ready(ffn_forward(x, w1, b1, w2, b2))
    assert out_f32.shape == (batch, seq, hidden_dim)
    assert jnp.allclose(out_f32, ref, atol=1e-5, rtol=1e-5), "f32 mismatch vs. reference"

    # bf16-MXU path (f32 accumulation): the production-throughput configuration.
    out_bf16 = jax.block_until_ready(
        ffn_forward(x, w1, b1, w2, b2, compute_dtype=jnp.bfloat16))
    assert out_bf16.shape == (batch, seq, hidden_dim)
    assert jnp.allclose(out_bf16, ref, atol=5e-2, rtol=5e-2), "bf16 mismatch vs. reference"

    print("KERNEL_OK")
</pallas_src>

<mosaic_0001>
module attributes {stable_mosaic.version = 11 : i64} {
  func.func @ffn_kernel(%arg0: i32, %arg1: i32, %arg2: memref<16x128xf32, #tpu.memory_space<vmem>>, %arg3: memref<128x128xf32, #tpu.memory_space<vmem>>, %arg4: memref<1x128xf32, #tpu.memory_space<vmem>>, %arg5: memref<128x128xf32, #tpu.memory_space<vmem>>, %arg6: memref<1x128xf32, #tpu.memory_space<vmem>>, %arg7: memref<16x128xf32, #tpu.memory_space<vmem>>, %arg8: memref<16x128xf32, #tpu.memory_space<vmem>>) attributes {dimension_semantics = [#tpu.dimension_semantics<parallel>, #tpu.dimension_semantics<arbitrary>], iteration_bounds = array<i64: 1, 1>, scalar_prefetch = 0 : i64, scratch_operands = 1 : i64, tpu.core_type = #tpu.core_type<tc>, window_params = [{transform_indices = @transform_0, window_bounds = array<i64: 16, 128>}, {transform_indices = @transform_1, window_bounds = array<i64: 128, 128>}, {transform_indices = @transform_2, window_bounds = array<i64: 1, 128>}, {transform_indices = @transform_3, window_bounds = array<i64: 128, 128>}, {pipeline_mode = #tpu.pipeline_mode<synchronous>, transform_indices = @transform_4, window_bounds = array<i64: 1, 128>}, {transform_indices = @transform_5, window_bounds = array<i64: 16, 128>}]} {
    %c0_i32 = arith.constant 0 : i32
    %0 = arith.cmpi eq, %arg1, %c0_i32 : i32
    %1 = arith.extui %0 : i1 to i32
    %c0_i32_0 = arith.constant 0 : i32
    %2 = arith.cmpi ne, %1, %c0_i32_0 : i32
    scf.if %2 {
      %cst_16 = arith.constant 0.000000e+00 : f32
      %19 = vector.broadcast %cst_16 : f32 to vector<16x128xf32>
      %c0_17 = arith.constant 0 : index
      %c0_18 = arith.constant 0 : index
      %20 = vector.load %arg8[%c0_17, %c0_18] : memref<16x128xf32, #tpu.memory_space<vmem>>, vector<16x128xf32>
      tpu.vector_store %arg8[%c0_17, %c0_18], %19 {strides = array<i32>} : memref<16x128xf32, #tpu.memory_space<vmem>>, vector<16x128xf32>,
    } else {
    }
    %c0 = arith.constant 0 : index
    %c0_1 = arith.constant 0 : index
    %3 = vector.load %arg2[%c0, %c0_1] : memref<16x128xf32, #tpu.memory_space<vmem>>, vector<16x128xf32>
    %c0_2 = arith.constant 0 : index
    %c0_3 = arith.constant 0 : index
    %4 = vector.load %arg3[%c0_2, %c0_3] : memref<128x128xf32, #tpu.memory_space<vmem>>, vector<128x128xf32>
    %cst = arith.constant dense<0.000000e+00> : vector<16x128xf32>
    %5 = tpu.matmul %3, %4, %cst {dimension_numbers = #tpu.dot_dimension_numbers<[1], [0], [0], [1], [0, 0, 1, 1], [], []>} : vector<16x128xf32>, vector<128x128xf32>, vector<16x128xf32> -> vector<16x128xf32>
    %c0_4 = arith.constant 0 : index
    %c0_5 = arith.constant 0 : index
    %6 = vector.load %arg4[%c0_4, %c0_5] : memref<1x128xf32, #tpu.memory_space<vmem>>, vector<1x128xf32>
    %7 = vector.broadcast %6 : vector<1x128xf32> to vector<16x128xf32>
    %8 = arith.addf %5, %7 : vector<16x128xf32>
    %cst_6 = arith.constant 0.000000e+00 : f32
    %9 = vector.broadcast %cst_6 : f32 to vector<16x128xf32>
    %10 = arith.maximumf %8, %9 : vector<16x128xf32>
    %c0_7 = arith.constant 0 : index
    %c0_8 = arith.constant 0 : index
    %11 = vector.load %arg8[%c0_7, %c0_8] : memref<16x128xf32, #tpu.memory_space<vmem>>, vector<16x128xf32>
    %c0_9 = arith.constant 0 : index
    %c0_10 = arith.constant 0 : index
    %12 = vector.load %arg5[%c0_9, %c0_10] : memref<128x128xf32, #tpu.memory_space<vmem>>, vector<128x128xf32>
    %cst_11 = arith.constant dense<0.000000e+00> : vector<16x128xf32>
    %13 = tpu.matmul %10, %12, %cst_11 {dimension_numbers = #tpu.dot_dimension_numbers<[1], [0], [0], [1], [0, 0, 1, 1], [], []>} : vector<16x128xf32>, vector<128x128xf32>, vector<16x128xf32> -> vector<16x128xf32>
    %14 = arith.addf %11, %13 : vector<16x128xf32>
    %c0_12 = arith.constant 0 : index
    %c0_13 = arith.constant 0 : index
    %15 = vector.load %arg8[%c0_12, %c0_13] : memref<16x128xf32, #tpu.memory_space<vmem>>, vector<16x128xf32>
    tpu.vector_store %arg8[%c0_12, %c0_13], %14 {strides = array<i32>} : memref<16x128xf32, #tpu.memory_space<vmem>>, vector<16x128xf32>,
    %c0_i32_14 = arith.constant 0 : i32
    %16 = arith.cmpi eq, %arg1, %c0_i32_14 : i32
    %17 = arith.extui %16 : i1 to i32
    %c0_i32_15 = arith.constant 0 : i32
    %18 = arith.cmpi ne, %17, %c0_i32_15 : i32
    scf.if %18 {
      %c0_16 = arith.constant 0 : index
      %c0_17 = arith.constant 0 : index
      %19 = vector.load %arg8[%c0_16, %c0_17] : memref<16x128xf32, #tpu.memory_space<vmem>>, vector<16x128xf32>
      %c0_18 = arith.constant 0 : index
      %c0_19 = arith.constant 0 : index
      %20 = vector.load %arg6[%c0_18, %c0_19] : memref<1x128xf32, #tpu.memory_space<vmem>>, vector<1x128xf32>
      %21 = vector.broadcast %20 : vector<1x128xf32> to vector<16x128xf32>
      %22 = arith.addf %19, %21 : vector<16x128xf32>
      %c0_20 = arith.constant 0 : index
      %c0_21 = arith.constant 0 : index
      %23 = vector.load %arg7[%c0_20, %c0_21] : memref<16x128xf32, #tpu.memory_space<vmem>>, vector<16x128xf32>
      tpu.vector_store %arg7[%c0_20, %c0_21], %22 {strides = array<i32>} : memref<16x128xf32, #tpu.memory_space<vmem>>, vector<16x128xf32>,
    } else {
    }
    return
  }
  func.func @transform_0(%arg0: i32, %arg1: i32) -> (i32, i32) {
    %c0_i32 = arith.constant 0 : i32
    %c0_i32_0 = arith.constant 0 : i32
    return %arg0, %c0_i32 : i32, i32
  }
  func.func @transform_1(%arg0: i32, %arg1: i32) -> (i32, i32) {
    %c0_i32 = arith.constant 0 : i32
    %c0_i32_0 = arith.constant 0 : i32
    return %c0_i32, %arg1 : i32, i32
  }
  func.func @transform_2(%arg0: i32, %arg1: i32) -> (i32, i32) {
    %c0_i32 = arith.constant 0 : i32
    %c0_i32_0 = arith.constant 0 : i32
    return %c0_i32, %arg1 : i32, i32
  }
  func.func @transform_3(%arg0: i32, %arg1: i32) -> (i32, i32) {
    %c0_i32 = arith.constant 0 : i32
    %c0_i32_0 = arith.constant 0 : i32
    return %arg1, %c0_i32 : i32, i32
  }
  func.func @transform_4(%arg0: i32, %arg1: i32) -> (i32, i32) {
    %c0_i32 = arith.constant 0 : i32
    %c0_i32_0 = arith.constant 0 : i32
    %c0_i32_1 = arith.constant 0 : i32
    return %c0_i32, %c0_i32_0 : i32, i32
  }
  func.func @transform_5(%arg0: i32, %arg1: i32) -> (i32, i32) {
    %c0_i32 = arith.constant 0 : i32
    %c0_i32_0 = arith.constant 0 : i32
    return %arg0, %c0_i32 : i32, i32
  }
}

</mosaic_0001>

<llo_original>
// kernel: tpu_custom_call.1
$region0: #{tpu_custom_call.1}
  #allocation0 [shape = 'u32[]', space=smem, size = 0x4, offset = 0x4, fixed_abs, tag = 'smem constant byte address 0x4 - core index']
  #allocation1 [shape = 'u32[144,128]{1,0:T(1,128)}', space=vmem, size = 0x12000, scoped, tag = 'internal scratch']
  #allocation2 [shape = 'f32[16,128]{1,0:T(8,128)}', space=vmem, size = 0x2000, scoped, tag = 'scratch operand']
  %s0 = inlined_call_operand.hbm [shape: f32[16,128], index: 0, kind: input, shape index: {}]
  %s1 = inlined_call_operand.hbm [shape: f32[128,128], index: 1, kind: input, shape index: {}]
  %s2 = inlined_call_operand.hbm [shape: f32[1,128], index: 2, kind: input, shape index: {}]
  %s3 = inlined_call_operand.hbm [shape: f32[128,128], index: 3, kind: input, shape index: {}]
  %s4 = inlined_call_operand.hbm [shape: f32[1,128], index: 4, kind: input, shape index: {}]
  %s5 = inlined_call_operand.hbm [shape: f32[16,128], index: 5, kind: output, shape index: {}]
  %s6 = sld [smem:[#allocation0]]
  $region58: #{tpu_custom_call.1} parent=0
    _
  %s8 = ssub.s32 1, %s6
  %s9 = scalar_select 0, %s8, %s6
  $region1: #{tpu_custom_call.1} parent=0
    #allocation3 [shape = 'u8[8192]{0}', space=vmem, size = 0x2000, scoped, tag = 'input window, operand 0, single buffered']
    #allocation4 [shape = 's32[1]{0}', space=sflag, size = 0x4, scoped, tag = 'scoped memory for tpu_custom_call.1']
    #allocation5 [shape = 's32[1]{0}', space=sflag, size = 0x4, scoped, tag = 'scoped memory for tpu_custom_call.1']
    #allocation6 [shape = 'u8[65536]{0}', space=vmem, size = 0x10000, scoped, tag = 'input window, operand 1, single buffered']
    #allocation7 [shape = 's32[1]{0}', space=sflag, size = 0x4, scoped, tag = 'scoped memory for tpu_custom_call.1']
    #allocation8 [shape = 'u8[512]{0}', space=vmem, size = 0x400, scoped, tag = 'input window, operand 2, single buffered']
    #allocation9 [shape = 'u8[65536]{0}', space=vmem, size = 0x10000, scoped, tag = 'input window, operand 3, single buffered']
    #allocation10 [shape = 's32[1]{0}', space=sflag, size = 0x4, scoped, tag = 'scoped memory for tpu_custom_call.1']
    #allocation11 [shape = 'u8[512]{0}', space=vmem, size = 0x400, scoped, tag = 'input window, operand 4, single buffered']
    #allocation12 [shape = 'u8[8192]{0}', space=vmem, size = 0x2000, scoped, tag = 'output window, operand 0, single buffered']
    %10 = vsyncpa [#allocation4], 0
    %11 = vsyncpa [#allocation7], 0
    %12 = vsyncpa [#allocation10], 0
    %13 = vsyncpa [#allocation5], 0
    // Predicated region
    $region2: #{tpu_custom_call.1} parent=1 // pred_check
      _
    $region3: #{tpu_custom_call.1} parent=1 // pred_check_branch
      %15 = sbr.rel (0) target = $region5
    $region4: #{tpu_custom_call.1} parent=1 // pred_region
      %s17 = ssub.s32 256, 256
      %18 = vsyncadd [#allocation4], %s17
      %s19 = sshll.u32 [#allocation3], 4
      %s20 = int_to_ptr.vmem [resolvable:$true] %s19
      %25 = dma.hbm_to_vmem [thread:$0]  %s0, 256, %s20, [#allocation4], 128, 128, 8
    $region5: #{tpu_custom_call.1} parent=1 // pred_fallthru
      _
    // Predicated region
    $region6: #{tpu_custom_call.1} parent=1 // pred_check
      _
    $region7: #{tpu_custom_call.1} parent=1 // pred_check_branch
      %27 = sbr.rel (0) target = $region9
    $region8: #{tpu_custom_call.1} parent=1 // pred_region
      %s29 = ssub.s32 2048, 2048
      %30 = vsyncadd [#allocation7], %s29
      %s31 = sshll.u32 [#allocation6], 4
      %s32 = int_to_ptr.vmem [resolvable:$true] %s31
      %37 = dma.hbm_to_vmem [thread:$0]  %s1, 2048, %s32, [#allocation7], 128, 128, 8
    $region9: #{tpu_custom_call.1} parent=1 // pred_fallthru
      _
    // Predicated region
    $region10: #{tpu_custom_call.1} parent=1 // pred_check
      _
    $region11: #{tpu_custom_call.1} parent=1 // pred_check_branch
      %39 = sbr.rel (0) target = $region13
    $region12: #{tpu_custom_call.1} parent=1 // pred_region
      %s41 = ssub.s32 16, 16
      %42 = vsyncadd [#allocation7], %s41
      %s44 = sshll.u32 [#allocation8], 4
      %s45 = int_to_ptr.vmem [resolvable:$true] %s44
      %47 = dma.hbm_to_vmem [thread:$0]  %s2, 16, %s45, [#allocation7]
    $region13: #{tpu_custom_call.1} parent=1 // pred_fallthru
      _
    // Predicated region
    $region14: #{tpu_custom_call.1} parent=1 // pred_check
      _
    $region15: #{tpu_custom_call.1} parent=1 // pred_check_branch
      %49 = sbr.rel (0) target = $region17
    $region16: #{tpu_custom_call.1} parent=1 // pred_region
      %s51 = ssub.s32 2048, 2048
      %52 = vsyncadd [#allocation10], %s51
      %s53 = sshll.u32 [#allocation9], 4
      %s54 = int_to_ptr.vmem [resolvable:$true] %s53
      %59 = dma.hbm_to_vmem [thread:$0]  %s3, 2048, %s54, [#allocation10], 128, 128, 8
    $region17: #{tpu_custom_call.1} parent=1 // pred_fallthru
      _
    // Predicated region
    $region18: #{tpu_custom_call.1} parent=1 // pred_check
      _
    $region19: #{tpu_custom_call.1} parent=1 // pred_check_branch
      %61 = sbr.rel (0) target = $region21
    $region20: #{tpu_custom_call.1} parent=1 // pred_region
      %s63 = ssub.s32 16, 16
      %64 = vsyncadd [#allocation10], %s63
      %s66 = sshll.u32 [#allocation11], 4
      %s67 = int_to_ptr.vmem [resolvable:$true] %s66
      %69 = dma.hbm_to_vmem [thread:$0]  %s4, 16, %s67, [#allocation10]
    $region21: #{tpu_custom_call.1} parent=1 // pred_fallthru
      _
    // Predicated region
    $region22: #{tpu_custom_call.1} parent=1 // pred_check
      _
    $region23: #{tpu_custom_call.1} parent=1 // pred_check_branch
      %71 = sbr.rel (0) target = $region25
    $region24: #{tpu_custom_call.1} parent=1 // pred_region
      %72 = dma.done [#allocation4], 256
    $region25: #{tpu_custom_call.1} parent=1 // pred_fallthru
      _
    // Predicated region
    $region26: #{tpu_custom_call.1} parent=1 // pred_check
      _
    $region27: #{tpu_custom_call.1} parent=1 // pred_check_branch
      %74 = sbr.rel (0) target = $region29
    $region28: #{tpu_custom_call.1} parent=1 // pred_region
      %75 = dma.done [#allocation7], 2048
    $region29: #{tpu_custom_call.1} parent=1 // pred_fallthru
      _
    // Predicated region
    $region30: #{tpu_custom_call.1} parent=1 // pred_check
      _
    $region31: #{tpu_custom_call.1} parent=1 // pred_check_branch
      %77 = sbr.rel (0) target = $region33
    $region32: #{tpu_custom_call.1} parent=1 // pred_region
      %78 = dma.done [#allocation7], 16
    $region33: #{tpu_custom_call.1} parent=1 // pred_fallthru
      _
    // Predicated region
    $region34: #{tpu_custom_call.1} parent=1 // pred_check
      _
    $region35: #{tpu_custom_call.1} parent=1 // pred_check_branch
      %80 = sbr.rel (0) target = $region37
    $region36: #{tpu_custom_call.1} parent=1 // pred_region
      %81 = dma.done [#allocation10], 2048
    $region37: #{tpu_custom_call.1} parent=1 // pred_fallthru
      _
    // Predicated region
    $region38: #{tpu_custom_call.1} parent=1 // pred_check
      _
    $region39: #{tpu_custom_call.1} parent=1 // pred_check_branch
      %83 = sbr.rel (0) target = $region41
    $region40: #{tpu_custom_call.1} parent=1 // pred_region
      %84 = dma.done [#allocation10], 16
    $region41: #{tpu_custom_call.1} parent=1 // pred_fallthru
      _
    %p85 = scmp.eq.s32.totalorder 0, 0
    // Predicated region
    $region42: #{tpu_custom_call.1} parent=1 // pred_check
      %p86 = pneg %p85
    $region43: #{tpu_custom_call.1} parent=1 // pred_check_branch
      %88 = sbr.rel (%p86) target = $region45
    $region44: #{tpu_custom_call.1} parent=1 // pred_region
      %89 = vst [vmem:[#allocation2] sm:$0xff] 0.0
      %90 = vst [vmem:[#allocation2 + $0x8] sm:$0xff] 0.0
    $region45: #{tpu_custom_call.1} parent=1 // pred_fallthru
      _
    %v91 = vld [vmem:[#allocation3] sm:$0xff]
    %v92 = vld [vmem:[#allocation3 + $0x8] sm:$0xff]
    %v93 = vld [vmem:[#allocation6] sm:$0xff]
    %v94 = vld [vmem:[#allocation6 + $0x8] sm:$0xff]
    %v95 = vld [vmem:[#allocation6 + $0x10] sm:$0xff]
    %v96 = vld [vmem:[#allocation6 + $0x18] sm:$0xff]
    %v97 = vld [vmem:[#allocation6 + $0x20] sm:$0xff]
    %v98 = vld [vmem:[#allocation6 + $0x28] sm:$0xff]
    %v99 = vld [vmem:[#allocation6 + $0x30] sm:$0xff]
    %v100 = vld [vmem:[#allocation6 + $0x38] sm:$0xff]
    %v101 = vld [vmem:[#allocation6 + $0x40] sm:$0xff]
    %v102 = vld [vmem:[#allocation6 + $0x48] sm:$0xff]
    %v103 = vld [vmem:[#allocation6 + $0x50] sm:$0xff]
    %v104 = vld [vmem:[#allocation6 + $0x58] sm:$0xff]
    %v105 = vld [vmem:[#allocation6 + $0x60] sm:$0xff]
    %v106 = vld [vmem:[#allocation6 + $0x68] sm:$0xff]
    %v107 = vld [vmem:[#allocation6 + $0x70] sm:$0xff]
    %v108 = vld [vmem:[#allocation6 + $0x78] sm:$0xff]
    %v109 = vld [vmem:[#allocation8] sm:$0x1]
    %v111 = vlaneseq
    %v112 = vshrl.u32 %v111, 7
    %v113 = vsub.s32 0, %v112
    %v114 = vrot.slane %v109, %v113
    %116 = vmatprep.subr.mxu0 0.0
    %117 = vmatpush1.msra.mxu0 %v93
    %118 = vmatprep.subr.mxu0 0.0
    %119 = vmatpush1.msra.mxu0 %v94
    %120 = vmatprep.subr.mxu0 0.0
    %121 = vmatpush1.msra.mxu0 %v95
    %122 = vmatprep.subr.mxu0 0.0
    %123 = vmatpush1.msra.mxu0 %v96
    %124 = vmatprep.subr.mxu0 0.0
    %125 = vmatpush1.msra.mxu0 %v97
    %126 = vmatprep.subr.mxu0 0.0
    %127 = vmatpush1.msra.mxu0 %v98
    %128 = vmatprep.subr.mxu0 0.0
    %129 = vmatpush1.msra.mxu0 %v99
    %130 = vmatprep.subr.mxu0 0.0
    %131 = vmatpush1.msra.mxu0 %v100
    %132 = vmatprep.subr.mxu0 0.0
    %133 = vmatpush1.msra.mxu0 %v101
    %134 = vmatprep.subr.mxu0 0.0
    %135 = vmatpush1.msra.mxu0 %v102
    %136 = vmatprep.subr.mxu0 0.0
    %137 = vmatpush1.msra.mxu0 %v103
    %138 = vmatprep.subr.mxu0 0.0
    %139 = vmatpush1.msra.mxu0 %v104
    %140 = vmatprep.subr.mxu0 0.0
    %141 = vmatpush1.msra.mxu0 %v105
    %142 = vmatprep.subr.mxu0 0.0
    %143 = vmatpush1.msra.mxu0 %v106
    %144 = vmatprep.subr.mxu0 0.0
    %145 = vmatpush1.msra.mxu0 %v107
    %146 = vmatprep.subr.mxu0 0.0
    %147 = vmatpush1.msra.mxu0 %v108
    %148 = vmatprep.subr.mxu0 0.0
    %149 = vmatpush1.msra.mxu0 0.0
    %150 = vmatprep.subr.mxu0 0.0
    %151 = vmatpush1.msra.mxu0 0.0
    %152 = vmatprep.subr.mxu0 0.0
    %153 = vmatpush1.msra.mxu0 0.0
    %154 = vmatprep.subr.mxu0 0.0
    %155 = vmatpush1.msra.mxu0 0.0
    %156 = vmatprep.subr.mxu0 0.0
    %157 = vmatpush1.msra.mxu0 0.0
    %158 = vmatprep.subr.mxu0 0.0
    %159 = vmatpush1.msra.mxu0 0.0
    %160 = vmatprep.subr.mxu0 0.0
    %161 = vmatpush1.msra.mxu0 0.0
    %162 = vmatprep.subr.mxu0 0.0
    %163 = vmatpush1.msra.mxu0 0.0
    %164 = vmatprep.subr.mxu0 0.0
    %165 = vmatpush1.msra.mxu0 0.0
    %166 = vmatprep.subr.mxu0 0.0
    %167 = vmatpush1.msra.mxu0 0.0
    %168 = vmatprep.subr.mxu0 0.0
    %169 = vmatpush1.msra.mxu0 0.0
    %170 = vmatprep.subr.mxu0 0.0
    %171 = vmatpush1.msra.mxu0 0.0
    %172 = vmatprep.subr.mxu0 0.0
    %173 = vmatpush1.msra.mxu0 0.0
    %174 = vmatprep.subr.mxu0 0.0
    %175 = vmatpush1.msra.mxu0 0.0
    %176 = vmatprep.subr.mxu0 0.0
    %177 = vmatpush1.msra.mxu0 0.0
    %178 = vmatprep.subr.mxu0 0.0
    %179 = vmatpush1.msra.mxu0 0.0
    %180 = vmatprep.mubr.f32.mxu0 0.0
    %181 = vmatmul.mubr.f32.gmra.mrb[0].mxu0 %v91
    %v182 = vpop.f32.mrb[0].mxu0
    %v183 = vadd.f32 %v114, %v182
    %v184 = vpop.f32.mrb[0].mxu0
    %185 = vmatprep.mubr.f32.mxu0 0.0
    %186 = vmatmul.mubr.f32.gmra.mrb[0].mxu0 %v92
    %v187 = vpop.f32.mrb[0].mxu0
    %v188 = vadd.f32 %v114, %v187
    %v189 = vpop.f32.mrb[0].mxu0
    %190 = vdwg.mxu0
    %v191 = vmax.f32 %v183, 0.0
    %v192 = vmax.f32 %v188, 0.0
    %v193 = vld [vmem:[#allocation2] sm:$0xff]
    %v194 = vld [vmem:[#allocation2 + $0x8] sm:$0xff]
    %v195 = vld [vmem:[#allocation9] sm:$0xff]
    %v196 = vld [vmem:[#allocation9 + $0x8] sm:$0xff]
    %v197 = vld [vmem:[#allocation9 + $0x10] sm:$0xff]
    %v198 = vld [vmem:[#allocation9 + $0x18] sm:$0xff]
    %v199 = vld [vmem:[#allocation9 + $0x20] sm:$0xff]
    %v200 = vld [vmem:[#allocation9 + $0x28] sm:$0xff]
    %v201 = vld [vmem:[#allocation9 + $0x30] sm:$0xff]
    %v202 = vld [vmem:[#allocation9 + $0x38] sm:$0xff]
    %v203 = vld [vmem:[#allocation9 + $0x40] sm:$0xff]
    %v204 = vld [vmem:[#allocation9 + $0x48] sm:$0xff]
    %v205 = vld [vmem:[#allocation9 + $0x50] sm:$0xff]
    %v206 = vld [vmem:[#allocation9 + $0x58] sm:$0xff]
    %v207 = vld [vmem:[#allocation9 + $0x60] sm:$0xff]
    %v208 = vld [vmem:[#allocation9 + $0x68] sm:$0xff]
    %v209 = vld [vmem:[#allocation9 + $0x70] sm:$0xff]
    %v210 = vld [vmem:[#allocation9 + $0x78] sm:$0xff]
    %211 = vmatprep.subr.mxu0 0.0
    %212 = vmatpush1.msra.mxu0 %v195
    %213 = vmatprep.subr.mxu0 0.0
    %214 = vmatpush1.msra.mxu0 %v196
    %215 = vmatprep.subr.mxu0 0.0
    %216 = vmatpush1.msra.mxu0 %v197
    %217 = vmatprep.subr.mxu0 0.0
    %218 = vmatpush1.msra.mxu0 %v198
    %219 = vmatprep.subr.mxu0 0.0
    %220 = vmatpush1.msra.mxu0 %v199
    %221 = vmatprep.subr.mxu0 0.0
    %222 = vmatpush1.msra.mxu0 %v200
    %223 = vmatprep.subr.mxu0 0.0
    %224 = vmatpush1.msra.mxu0 %v201
    %225 = vmatprep.subr.mxu0 0.0
    %226 = vmatpush1.msra.mxu0 %v202
    %227 = vmatprep.subr.mxu0 0.0
    %228 = vmatpush1.msra.mxu0 %v203
    %229 = vmatprep.subr.mxu0 0.0
    %230 = vmatpush1.msra.mxu0 %v204
    %231 = vmatprep.subr.mxu0 0.0
    %232 = vmatpush1.msra.mxu0 %v205
    %233 = vmatprep.subr.mxu0 0.0
    %234 = vmatpush1.msra.mxu0 %v206
    %235 = vmatprep.subr.mxu0 0.0
    %236 = vmatpush1.msra.mxu0 %v207
    %237 = vmatprep.subr.mxu0 0.0
    %238 = vmatpush1.msra.mxu0 %v208
    %239 = vmatprep.subr.mxu0 0.0
    %240 = vmatpush1.msra.mxu0 %v209
    %241 = vmatprep.subr.mxu0 0.0
    %242 = vmatpush1.msra.mxu0 %v210
    %243 = vmatprep.subr.mxu0 0.0
    %244 = vmatpush1.msra.mxu0 0.0
    %245 = vmatprep.subr.mxu0 0.0
    %246 = vmatpush1.msra.mxu0 0.0
    %247 = vmatprep.subr.mxu0 0.0
    %248 = vmatpush1.msra.mxu0 0.0
    %249 = vmatprep.subr.mxu0 0.0
    %250 = vmatpush1.msra.mxu0 0.0
    %251 = vmatprep.subr.mxu0 0.0
    %252 = vmatpush1.msra.mxu0 0.0
    %253 = vmatprep.subr.mxu0 0.0
    %254 = vmatpush1.msra.mxu0 0.0
    %255 = vmatprep.subr.mxu0 0.0
    %256 = vmatpush1.msra.mxu0 0.0
    %257 = vmatprep.subr.mxu0 0.0
    %258 = vmatpush1.msra.mxu0 0.0
    %259 = vmatprep.subr.mxu0 0.0
    %260 = vmatpush1.msra.mxu0 0.0
    %261 = vmatprep.subr.mxu0 0.0
    %262 = vmatpush1.msra.mxu0 0.0
    %263 = vmatprep.subr.mxu0 0.0
    %264 = vmatpush1.msra.mxu0 0.0
    %265 = vmatprep.subr.mxu0 0.0
    %266 = vmatpush1.msra.mxu0 0.0
    %267 = vmatprep.subr.mxu0 0.0
    %268 = vmatpush1.msra.mxu0 0.0
    %269 = vmatprep.subr.mxu0 0.0
    %270 = vmatpush1.msra.mxu0 0.0
    %271 = vmatprep.subr.mxu0 0.0
    %272 = vmatpush1.msra.mxu0 0.0
    %273 = vmatprep.subr.mxu0 0.0
    %274 = vmatpush1.msra.mxu0 0.0
    %275 = vmatprep.mubr.f32.mxu0 0.0
    %276 = vmatmul.mubr.f32.gmra.mrb[0].mxu0 %v191
    %v277 = vpop.f32.mrb[0].mxu0
    %v278 = vadd.f32 0.0, %v277
    %v279 = vpop.f32.mrb[0].mxu0
    %280 = vmatprep.mubr.f32.mxu0 0.0
    %281 = vmatmul.mubr.f32.gmra.mrb[0].mxu0 %v192
    %v282 = vpop.f32.mrb[0].mxu0
    %v283 = vadd.f32 0.0, %v282
    %v284 = vpop.f32.mrb[0].mxu0
    %285 = vdwg.mxu0
    %v286 = vadd.f32 %v193, %v278
    %v287 = vadd.f32 %v194, %v283
    %288 = vst [vmem:[#allocation2] sm:$0xff] %v286
    %289 = vst [vmem:[#allocation2 + $0x8] sm:$0xff] %v287
    // Predicated region
    $region46: #{tpu_custom_call.1} parent=1 // pred_check
      %p290 = pneg %p85
    $region47: #{tpu_custom_call.1} parent=1 // pred_check_branch
      %292 = sbr.rel (%p290) target = $region49
    $region48: #{tpu_custom_call.1} parent=1 // pred_region
      %v293 = vld [vmem:[#allocation2] sm:$0xff]
      %v294 = vld [vmem:[#allocation2 + $0x8] sm:$0xff]
      %v295 = vld [vmem:[#allocation11] sm:$0x1]
      %v297 = vlaneseq
      %v298 = vshrl.u32 %v297, 7
      %v299 = vsub.s32 0, %v298
      %v300 = vrot.slane %v295, %v299
      %v302 = vadd.f32 %v293, %v300
      %v303 = vadd.f32 %v294, %v300
      %304 = vst [vmem:[#allocation12] sm:$0xff] %v302
      %305 = vst [vmem:[#allocation12 + $0x8] sm:$0xff] %v303
    $region49: #{tpu_custom_call.1} parent=1 // pred_fallthru
      _
    // Predicated region
    $region50: #{tpu_custom_call.1} parent=1 // pred_check
      _
    $region51: #{tpu_custom_call.1} parent=1 // pred_check_branch
      %307 = sbr.rel (0) target = $region53
    $region52: #{tpu_custom_call.1} parent=1 // pred_region
      %s309 = ssub.s32 256, 256
      %310 = vsyncadd [#allocation5], %s309
      %s311 = sshll.u32 [#allocation12], 4
      %s312 = int_to_ptr.vmem [resolvable:$true] %s311
      %317 = dma.vmem_to_hbm [thread:$0]  %s312, 256, %s5, [#allocation5], 128, 128, 8
    $region53: #{tpu_custom_call.1} parent=1 // pred_fallthru
      _
    // Predicated region
    $region54: #{tpu_custom_call.1} parent=1 // pred_check
      _
    $region55: #{tpu_custom_call.1} parent=1 // pred_check_branch
      %319 = sbr.rel (0) target = $region57
    $region56: #{tpu_custom_call.1} parent=1 // pred_region
      %320 = dma.done [#allocation5], 256
    $region57: #{tpu_custom_call.1} parent=1 // pred_fallthru
      _
    %321 = vsyncpa [#allocation4], 1
    %322 = vsyncpa [#allocation7], 1
    %323 = vsyncpa [#allocation10], 1
    %324 = vsyncpa [#allocation5], 1

</llo_original>
